<compile_context>
chip_gen: v7x
topology: tpu7x:2x2x1
jax: 0.10.0
libtpu: 0.0.40
codegen_flags: <defaults>
</compile_context>

<pallas_src>
import jax
import jax.numpy as jnp
from jax.experimental import pallas as pl
from jax.experimental.pallas import tpu as pltpu


_NEG_BIG = -1.0e30  # finite "minus infinity" for padded logit columns


def _round_up(x, m):
    return ((x + m - 1) // m) * m


def _cdiv(a, b):
    return -(-a // b)


def _vmem_capacity_bytes():
    """Physical VMEM per TensorCore; conservative (v7x-sized) fallback."""
    try:
        info = pltpu.get_tpu_info()
        cap = getattr(info, "vmem_capacity_bytes", None)
        if cap:
            return int(cap)
    except Exception:
        pass
    return 64 * 1024 * 1024


# ----------------------------------------------------------------------------
# Kernel
# ----------------------------------------------------------------------------
def forger_kernel(comb_ref, w_i2h_ref, b_i2h_ref, w_i2o_ref, b_i2o_ref,
                  pre_ref, hidden_ref, lse_ref, m_ref, s_ref):
    """One streamed column tile of the fused i2h/i2o GEMM + online log-softmax.

    Grid: (num_splits, tiles_per_split).  The outer ("parallel") axis shards the
    i2o column stream across TensorCores; the inner ("arbitrary") axis walks the
    streamed weight tiles with an online logsumexp carried in VMEM scratch.
    Per-split logsumexps are merged in the wrapper.

      comb_ref   : (B, C)      bf16  resident activations [input ; hidden]
      w_i2h_ref  : (C, Hp)     bf16  resident (small)
      b_i2h_ref  : (1, Hp)     f32   resident
      w_i2o_ref  : (C, TN)     bf16  streamed weight tile
      b_i2o_ref  : (1, TN)     f32   streamed bias tile (_NEG_BIG on padded cols)
      pre_ref    : (B, TN)     f32   un-normalized logits tile (output)
      hidden_ref : (1, B, Hp)  f32   new hidden state (output, per split)
      lse_ref    : (1, B, 1)   f32   per-split logsumexp (output)
      m_ref,s_ref: (B, 1)      f32   running max / rescaled sum (VMEM scratch)
    """
    j = pl.program_id(1)
    comb = comb_ref[...]                                    # (B, C) bf16

    @pl.when(j == 0)
    def _():
        m_ref[...] = jnp.full_like(m_ref, -jnp.inf)
        s_ref[...] = jnp.zeros_like(s_ref)
        # Small resident GEMM; recomputed once per split (negligible cost) so
        # each split's output block is written independently (race-free on
        # dual-TC parts).
        hidden_ref[...] = (
            jnp.dot(comb, w_i2h_ref[...], preferred_element_type=jnp.float32)
            + b_i2h_ref[...])[None]

    # presoftmax tile = comb @ w_i2o[:, tile] + b_i2o[tile]   (MXU, f32 acc)
    pre = (jnp.dot(comb, w_i2o_ref[...], preferred_element_type=jnp.float32)
           + b_i2o_ref[...])                                # (B, TN) f32
    pre_ref[...] = pre

    # Online (flash-style) logsumexp over this split's tiles.  Padded columns
    # carry a large-negative FINITE bias, so exp() underflows to exactly 0 and
    # an all-padded trailing tile cannot produce inf-inf NaNs.
    m_old = m_ref[...]
    m_new = jnp.maximum(m_old, jnp.max(pre, axis=-1, keepdims=True))
    s_new = (s_ref[...] * jnp.exp(m_old - m_new)
             + jnp.sum(jnp.exp(pre - m_new), axis=-1, keepdims=True))
    m_ref[...] = m_new
    s_ref[...] = s_new

    @pl.when(j == pl.num_programs(1) - 1)
    def _():
        lse_ref[...] = (m_new + jnp.log(s_new))[None]


# ----------------------------------------------------------------------------
# One-time parameter preparation (hoisted out of the per-timestep hot path)
# ----------------------------------------------------------------------------
def prepare_forger_params(w_i2h, b_i2h, w_i2o, b_i2o, *,
                          tile_n=None, weight_dtype=jnp.bfloat16,
                          num_splits=None):
    """Cast/pad the parameters once; reuse across recurrent timesteps.

    w_i2h: (C, hidden_size), b_i2h: (hidden_size,)
    w_i2o: (C, input_size),  b_i2o: (input_size,)  with C = input_size + hidden_size
    """
    C, hidden_size = int(w_i2h.shape[0]), int(w_i2h.shape[1])
    input_size = int(w_i2o.shape[1])
    assert int(w_i2o.shape[0]) == C and C == input_size + hidden_size
    wbytes = jnp.dtype(weight_dtype).itemsize
    vmem_cap = _vmem_capacity_bytes()

    if tile_n is None:
        # Double-buffered streamed (C, TN) weight tile budget:
        #   ~44 MiB on 128 MiB parts (v5e/v6e) -> tile_n ~ 1024 at C ~ 10128
        #   ~22 MiB on 64 MiB parts (v7x)      -> tile_n ~ 512
        budget = (44 if vmem_cap >= 96 * 1024 * 1024 else 22) * 1024 * 1024
        tile_n = (budget // (2 * C * wbytes)) // 128 * 128
    tile_n = int(max(128, min(tile_n, _round_up(input_size, 128))))

    num_tiles = _cdiv(input_size, tile_n)
    if num_splits is None:
        # Two independent column-stream splits so dual-TC chips (v7x) use both
        # TensorCores; on single-TC chips the outer axis just runs sequentially.
        num_splits = 2 if num_tiles >= 2 else 1
    num_splits = int(max(1, min(num_splits, num_tiles)))
    tiles_per_split = _cdiv(num_tiles, num_splits)
    i_pad = num_splits * tiles_per_split * tile_n
    h_pad = _round_up(hidden_size, 128)

    # Invariant for the online logsumexp: every split must see at least one
    # valid (non-padded) column in its first tile.
    for c in range(num_splits):
        assert c * tiles_per_split * tile_n < input_size, (
            "empty column-stream split: adjust tile_n / num_splits")

    w_i2h_p = jnp.zeros((C, h_pad), weight_dtype).at[:, :hidden_size].set(
        w_i2h.astype(weight_dtype))
    b_i2h_p = jnp.zeros((1, h_pad), jnp.float32).at[0, :hidden_size].set(
        b_i2h.astype(jnp.float32))
    # TODO(synk): optionally stream w_i2o as int8 (v5e/v6e) / fp8 (v7x) with
    # per-column scales folded into the bias for ~2x on this BW-bound GEMV.
    w_i2o_p = jnp.zeros((C, i_pad), weight_dtype).at[:, :input_size].set(
        w_i2o.astype(weight_dtype))
    b_i2o_p = jnp.full((1, i_pad), _NEG_BIG, jnp.float32).at[0, :input_size].set(
        b_i2o.astype(jnp.float32))

    return dict(
        w_i2h=w_i2h_p, b_i2h=b_i2h_p, w_i2o=w_i2o_p, b_i2o=b_i2o_p,
        input_size=input_size, hidden_size=hidden_size, C=C,
        tile_n=tile_n, i_pad=i_pad, h_pad=h_pad,
        num_splits=num_splits, tiles_per_split=tiles_per_split,
        weight_dtype=weight_dtype, vmem_cap=vmem_cap)


# ----------------------------------------------------------------------------
# Per-timestep forward (hot path)
# ----------------------------------------------------------------------------
def forger_forward_prepared(params, x, h):
    """Forward pass using pre-padded/cast parameters.

    x: (input_size,) or (B, input_size);  h: (hidden_size,) or (B, hidden_size).
    Returns (log_softmax_output, new_hidden) with matching leading shape.
    """
    p = params
    squeeze = (x.ndim == 1)
    xb = x[None] if squeeze else x
    hb = h[None] if squeeze else h
    B = int(xb.shape[0])
    C, h_pad, i_pad = p["C"], p["h_pad"], p["i_pad"]
    tile_n = p["tile_n"]
    num_splits = p["num_splits"]
    tiles_per_split = p["tiles_per_split"]
    wdt = p["weight_dtype"]
    wbytes = jnp.dtype(wdt).itemsize

    comb = jnp.concatenate([xb, hb], axis=1).astype(wdt)     # (B, C)

    # VMEM limit: actual double-buffered footprint + headroom, capped well
    # below physical capacity (64 MiB on v7x, 128 MiB on v5e/v6e).
    resident_in = C * h_pad * wbytes + h_pad * 4 + B * C * wbytes
    streamed_in = C * tile_n * wbytes + tile_n * 4
    out_bytes = B * tile_n * 4 + B * (h_pad + 1) * 4
    vmem_limit = 2 * (resident_in + streamed_in + out_bytes) + 12 * 1024 * 1024
    vmem_limit = int(min(max(vmem_limit, 32 * 1024 * 1024),
                         int(p["vmem_cap"] * 0.8)))

    cost = pl.CostEstimate(
        flops=2 * B * C * (i_pad + num_splits * h_pad),
        transcendentals=B * i_pad,
        bytes_accessed=int(
            (p["w_i2o"].size + p["w_i2h"].size + comb.size) * wbytes
            + 4 * (i_pad + h_pad)
            + 4 * B * (i_pad + num_splits * (h_pad + 1))),
    )

    def col_map(c, j):
        return (0, c * tiles_per_split + j)

    pre, hidden, lse = pl.pallas_call(
        forger_kernel,
        out_shape=(
            jax.ShapeDtypeStruct((B, i_pad), jnp.float32),              # logits
            jax.ShapeDtypeStruct((num_splits, B, h_pad), jnp.float32),  # hidden
            jax.ShapeDtypeStruct((num_splits, B, 1), jnp.float32),      # lse
        ),
        grid_spec=pltpu.PrefetchScalarGridSpec(
            num_scalar_prefetch=0,
            grid=(num_splits, tiles_per_split),
            in_specs=[
                pl.BlockSpec((B, C), lambda c, j: (0, 0)),        # comb (resident)
                pl.BlockSpec((C, h_pad), lambda c, j: (0, 0)),    # w_i2h (resident)
                pl.BlockSpec((1, h_pad), lambda c, j: (0, 0)),    # b_i2h (resident)
                pl.BlockSpec((C, tile_n), col_map),               # w_i2o (streamed)
                pl.BlockSpec((1, tile_n), col_map),               # b_i2o (streamed)
            ],
            out_specs=(
                pl.BlockSpec((B, tile_n), col_map),                    # pre tile
                pl.BlockSpec((1, B, h_pad), lambda c, j: (c, 0, 0)),   # hidden
                pl.BlockSpec((1, B, 1), lambda c, j: (c, 0, 0)),       # lse
            ),
            scratch_shapes=[pltpu.VMEM((B, 1), jnp.float32),      # running max
                            pltpu.VMEM((B, 1), jnp.float32)],     # running sum
        ),
        compiler_params=pltpu.CompilerParams(
            # Outer axis: independent column-stream splits (one per TensorCore
            # on dual-TC chips).  Inner axis: sequential online-lse reduction.
            dimension_semantics=("parallel", "arbitrary"),
            vmem_limit_bytes=vmem_limit,
        ),
        cost_estimate=cost,
    )(comb, p["w_i2h"], p["b_i2h"], p["w_i2o"], p["b_i2o"])

    # Tiny finalize in the wrapper: merge per-split logsumexps, log-softmax,
    # and slice off lane padding.
    lse_global = jax.scipy.special.logsumexp(lse[:, :, 0], axis=0)   # (B,)
    out = pre[:, :p["input_size"]] - lse_global[:, None]
    hidden_out = hidden[0, :, :p["hidden_size"]]
    if squeeze:
        return out[0], hidden_out[0]
    return out, hidden_out


def forger_forward(x, h, w_i2h, b_i2h, w_i2o, b_i2o, **prep_kwargs):
    """One-shot convenience wrapper (prepare + forward).  For recurrent use,
    call prepare_forger_params() once and forger_forward_prepared() per step."""
    params = prepare_forger_params(w_i2h, b_i2h, w_i2o, b_i2o, **prep_kwargs)
    return forger_forward_prepared(params, x, h)


# ----------------------------------------------------------------------------
# Reference, init and checks
# ----------------------------------------------------------------------------
def forger_forward_ref(x, h, w_i2h, b_i2h, w_i2o, b_i2o,
                       weight_dtype=jnp.bfloat16):
    """Pure-JAX reference using the same bf16 weight/activation rounding."""
    squeeze = (x.ndim == 1)
    xb = x[None] if squeeze else x
    hb = h[None] if squeeze else h
    comb = jnp.concatenate([xb, hb], axis=1).astype(weight_dtype).astype(jnp.float32)
    wh = w_i2h.astype(weight_dtype).astype(jnp.float32)
    wo = w_i2o.astype(weight_dtype).astype(jnp.float32)
    hidden = comb @ wh + b_i2h.astype(jnp.float32)[None]
    pre = comb @ wo + b_i2o.astype(jnp.float32)[None]
    out = pre - jax.scipy.special.logsumexp(pre, axis=-1, keepdims=True)
    if squeeze:
        return out[0], hidden[0]
    return out, hidden


def init_params(key, input_size, hidden_size):
    """torch.nn.Linear-style uniform init; weights stored as (in, out)."""
    C = input_size + hidden_size
    k = 1.0 / jnp.sqrt(jnp.float32(C))
    k1, k2, k3, k4 = jax.random.split(key, 4)
    w_i2h = jax.random.uniform(k1, (C, hidden_size), jnp.float32, -k, k)
    b_i2h = jax.random.uniform(k2, (hidden_size,), jnp.float32, -k, k)
    w_i2o = jax.random.uniform(k3, (C, input_size), jnp.float32, -k, k)
    b_i2o = jax.random.uniform(k4, (input_size,), jnp.float32, -k, k)
    return w_i2h, b_i2h, w_i2o, b_i2o


def _check(input_size, hidden_size, key, tile_n=None, batch=None, steps=2):
    kp, kx = jax.random.split(key)
    w_i2h, b_i2h, w_i2o, b_i2o = init_params(kp, input_size, hidden_size)
    # Prepare once (hoisted cast/pad), reuse across recurrent timesteps.
    params = prepare_forger_params(w_i2h, b_i2h, w_i2o, b_i2o, tile_n=tile_n)

    if batch is None:
        xs = jax.random.normal(kx, (steps, input_size), jnp.float32)
        h = jnp.zeros((hidden_size,), jnp.float32)          # initHidden()
        h_ref = h
    else:
        xs = jax.random.normal(kx, (steps, batch, input_size), jnp.float32)
        h = jnp.zeros((batch, hidden_size), jnp.float32)
        h_ref = h

    for t in range(steps):
        out, h = forger_forward_prepared(params, xs[t], h)
        out, h = jax.block_until_ready((out, h))
        out_ref, h_ref = forger_forward_ref(xs[t], h_ref, w_i2h, b_i2h,
                                            w_i2o, b_i2o)
        assert out.shape == out_ref.shape and h.shape == h_ref.shape
        assert jnp.allclose(out, out_ref, atol=2e-3, rtol=2e-3), \
            float(jnp.max(jnp.abs(out - out_ref)))
        assert jnp.allclose(h, h_ref, atol=2e-3, rtol=2e-3), \
            float(jnp.max(jnp.abs(h - h_ref)))


if __name__ == "__main__":
    key = jax.random.PRNGKey(0)
    k1, k2, k3 = jax.random.split(key, 3)

    # Small single-tile case (real module uses input_size=10000; code is generic).
    _check(input_size=32, hidden_size=32, key=k1)

    # Multi-tile case: tile_n=128 -> 3 column tiles, split into 2 streams of 2
    # (one fully padded trailing tile).  Exercises the streamed weight pipeline,
    # the dual-core "parallel" split and the online logsumexp merge.
    _check(input_size=300, hidden_size=48, key=k2, tile_n=128)

    # Batched case: one streamed weight pass amortized over B=3 rows.
    _check(input_size=300, hidden_size=48, key=k3, tile_n=128, batch=3)

    print("KERNEL_OK")
</pallas_src>

<mosaic_0001>
module attributes {stable_mosaic.version = 11 : i64} {
  func.func @forger_kernel(%arg0: i32, %arg1: i32, %arg2: memref<1x64xbf16, #tpu.memory_space<vmem>>, %arg3: memref<64x128xbf16, #tpu.memory_space<vmem>>, %arg4: memref<1x128xf32, #tpu.memory_space<vmem>>, %arg5: memref<64x128xbf16, #tpu.memory_space<vmem>>, %arg6: memref<1x128xf32, #tpu.memory_space<vmem>>, %arg7: memref<1x128xf32, #tpu.memory_space<vmem>>, %arg8: memref<1x1x128xf32, #tpu.memory_space<vmem>>, %arg9: memref<1x1x1xf32, #tpu.memory_space<vmem>>, %arg10: memref<1x1xf32, #tpu.memory_space<vmem>>, %arg11: memref<1x1xf32, #tpu.memory_space<vmem>>) attributes {dimension_semantics = [#tpu.dimension_semantics<parallel>, #tpu.dimension_semantics<arbitrary>], iteration_bounds = array<i64: 1, 1>, scalar_prefetch = 0 : i64, scratch_operands = 2 : i64, tpu.core_type = #tpu.core_type<tc>, window_params = [{pipeline_mode = #tpu.pipeline_mode<synchronous>, transform_indices = @transform_0, window_bounds = array<i64: 1, 64>}, {pipeline_mode = #tpu.pipeline_mode<synchronous>, transform_indices = @transform_1, window_bounds = array<i64: 64, 128>}, {pipeline_mode = #tpu.pipeline_mode<synchronous>, transform_indices = @transform_2, window_bounds = array<i64: 1, 128>}, {transform_indices = @transform_3, window_bounds = array<i64: 64, 128>}, {transform_indices = @transform_4, window_bounds = array<i64: 1, 128>}, {transform_indices = @transform_5, window_bounds = array<i64: 1, 128>}, {transform_indices = @transform_6, window_bounds = array<i64: 1, 1, 128>}, {transform_indices = @transform_7, window_bounds = array<i64: 1, 1, 1>}]} {
    %c0 = arith.constant 0 : index
    %c0_0 = arith.constant 0 : index
    %0 = vector.load %arg2[%c0, %c0_0] : memref<1x64xbf16, #tpu.memory_space<vmem>>, vector<1x64xbf16>
    %c0_i32 = arith.constant 0 : i32
    %1 = arith.cmpi eq, %arg1, %c0_i32 : i32
    %2 = arith.extui %1 : i1 to i32
    %c0_i32_1 = arith.constant 0 : i32
    %3 = arith.cmpi ne, %2, %c0_i32_1 : i32
    scf.if %3 {
      %cst_20 = arith.constant 0xFF800000 : f32
      %28 = vector.broadcast %cst_20 : f32 to vector<1x1xf32>
      %c0_21 = arith.constant 0 : index
      %c0_22 = arith.constant 0 : index
      %29 = vector.load %arg10[%c0_21, %c0_22] : memref<1x1xf32, #tpu.memory_space<vmem>>, vector<1x1xf32>
      tpu.vector_store %arg10[%c0_21, %c0_22], %28 {strides = array<i32>} : memref<1x1xf32, #tpu.memory_space<vmem>>, vector<1x1xf32>,
      %cst_23 = arith.constant 0.000000e+00 : f32
      %30 = vector.broadcast %cst_23 : f32 to vector<1x1xf32>
      %c0_24 = arith.constant 0 : index
      %c0_25 = arith.constant 0 : index
      %31 = vector.load %arg11[%c0_24, %c0_25] : memref<1x1xf32, #tpu.memory_space<vmem>>, vector<1x1xf32>
      tpu.vector_store %arg11[%c0_24, %c0_25], %30 {strides = array<i32>} : memref<1x1xf32, #tpu.memory_space<vmem>>, vector<1x1xf32>,
      %c0_26 = arith.constant 0 : index
      %c0_27 = arith.constant 0 : index
      %32 = vector.load %arg3[%c0_26, %c0_27] : memref<64x128xbf16, #tpu.memory_space<vmem>>, vector<64x128xbf16>
      %cst_28 = arith.constant dense<0.000000e+00> : vector<1x128xf32>
      %33 = tpu.matmul %0, %32, %cst_28 {dimension_numbers = #tpu.dot_dimension_numbers<[1], [0], [0], [1], [0, 0, 1, 1], [], []>} : vector<1x64xbf16>, vector<64x128xbf16>, vector<1x128xf32> -> vector<1x128xf32>
      %c0_29 = arith.constant 0 : index
      %c0_30 = arith.constant 0 : index
      %34 = vector.load %arg4[%c0_29, %c0_30] : memref<1x128xf32, #tpu.memory_space<vmem>>, vector<1x128xf32>
      %35 = arith.addf %33, %34 : vector<1x128xf32>
      %36 = vector.shape_cast %35 : vector<1x128xf32> to vector<1x1x128xf32>
      %c0_31 = arith.constant 0 : index
      %c0_32 = arith.constant 0 : index
      %c0_33 = arith.constant 0 : index
      %37 = vector.load %arg8[%c0_31, %c0_32, %c0_33] : memref<1x1x128xf32, #tpu.memory_space<vmem>>, vector<1x1x128xf32>
      tpu.vector_store %arg8[%c0_31, %c0_32, %c0_33], %36 {strides = array<i32>} : memref<1x1x128xf32, #tpu.memory_space<vmem>>, vector<1x1x128xf32>,
    } else {
    }
    %c0_2 = arith.constant 0 : index
    %c0_3 = arith.constant 0 : index
    %4 = vector.load %arg5[%c0_2, %c0_3] : memref<64x128xbf16, #tpu.memory_space<vmem>>, vector<64x128xbf16>
    %cst = arith.constant dense<0.000000e+00> : vector<1x128xf32>
    %5 = tpu.matmul %0, %4, %cst {dimension_numbers = #tpu.dot_dimension_numbers<[1], [0], [0], [1], [0, 0, 1, 1], [], []>} : vector<1x64xbf16>, vector<64x128xbf16>, vector<1x128xf32> -> vector<1x128xf32>
    %c0_4 = arith.constant 0 : index
    %c0_5 = arith.constant 0 : index
    %6 = vector.load %arg6[%c0_4, %c0_5] : memref<1x128xf32, #tpu.memory_space<vmem>>, vector<1x128xf32>
    %7 = arith.addf %5, %6 : vector<1x128xf32>
    %c0_6 = arith.constant 0 : index
    %c0_7 = arith.constant 0 : index
    %8 = vector.load %arg7[%c0_6, %c0_7] : memref<1x128xf32, #tpu.memory_space<vmem>>, vector<1x128xf32>
    tpu.vector_store %arg7[%c0_6, %c0_7], %7 {strides = array<i32>} : memref<1x128xf32, #tpu.memory_space<vmem>>, vector<1x128xf32>,
    %c0_8 = arith.constant 0 : index
    %c0_9 = arith.constant 0 : index
    %9 = vector.load %arg10[%c0_8, %c0_9] : memref<1x1xf32, #tpu.memory_space<vmem>>, vector<1x1xf32>
    %cst_10 = arith.constant dense<0xFF800000> : vector<1xf32>
    %10 = vector.multi_reduction <maximumf>, %7, %cst_10 [1] : vector<1x128xf32> to vector<1xf32>
    %11 = vector.shape_cast %10 : vector<1xf32> to vector<1x1xf32>
    %12 = arith.maximumf %9, %11 : vector<1x1xf32>
    %c0_11 = arith.constant 0 : index
    %c0_12 = arith.constant 0 : index
    %13 = vector.load %arg11[%c0_11, %c0_12] : memref<1x1xf32, #tpu.memory_space<vmem>>, vector<1x1xf32>
    %14 = arith.subf %9, %12 : vector<1x1xf32>
    %15 = math.exp %14 : vector<1x1xf32>
    %16 = arith.mulf %13, %15 : vector<1x1xf32>
    %17 = vector.broadcast %12 : vector<1x1xf32> to vector<1x128xf32>
    %18 = arith.subf %7, %17 : vector<1x128xf32>
    %19 = math.exp %18 : vector<1x128xf32>
    %cst_13 = arith.constant dense<0.000000e+00> : vector<1xf32>
    %20 = vector.multi_reduction <add>, %19, %cst_13 [1] : vector<1x128xf32> to vector<1xf32>
    %21 = vector.shape_cast %20 : vector<1xf32> to vector<1x1xf32>
    %22 = arith.addf %16, %21 : vector<1x1xf32>
    %c0_14 = arith.constant 0 : index
    %c0_15 = arith.constant 0 : index
    %23 = vector.load %arg10[%c0_14, %c0_15] : memref<1x1xf32, #tpu.memory_space<vmem>>, vector<1x1xf32>
    tpu.vector_store %arg10[%c0_14, %c0_15], %12 {strides = array<i32>} : memref<1x1xf32, #tpu.memory_space<vmem>>, vector<1x1xf32>,
    %c0_16 = arith.constant 0 : index
    %c0_17 = arith.constant 0 : index
    %24 = vector.load %arg11[%c0_16, %c0_17] : memref<1x1xf32, #tpu.memory_space<vmem>>, vector<1x1xf32>
    tpu.vector_store %arg11[%c0_16, %c0_17], %22 {strides = array<i32>} : memref<1x1xf32, #tpu.memory_space<vmem>>, vector<1x1xf32>,
    %c0_i32_18 = arith.constant 0 : i32
    %25 = arith.cmpi eq, %arg1, %c0_i32_18 : i32
    %26 = arith.extui %25 : i1 to i32
    %c0_i32_19 = arith.constant 0 : i32
    %27 = arith.cmpi ne, %26, %c0_i32_19 : i32
    scf.if %27 {
      %28 = math.log %22 : vector<1x1xf32>
      %29 = arith.addf %12, %28 : vector<1x1xf32>
      %30 = vector.shape_cast %29 : vector<1x1xf32> to vector<1x1x1xf32>
      %c0_20 = arith.constant 0 : index
      %c0_21 = arith.constant 0 : index
      %c0_22 = arith.constant 0 : index
      %31 = vector.load %arg9[%c0_20, %c0_21, %c0_22] : memref<1x1x1xf32, #tpu.memory_space<vmem>>, vector<1x1x1xf32>
      tpu.vector_store %arg9[%c0_20, %c0_21, %c0_22], %30 {strides = array<i32>} : memref<1x1x1xf32, #tpu.memory_space<vmem>>, vector<1x1x1xf32>,
    } else {
    }
    return
  }
  func.func @transform_0(%arg0: i32, %arg1: i32) -> (i32, i32) {
    %c0_i32 = arith.constant 0 : i32
    %c0_i32_0 = arith.constant 0 : i32
    %c0_i32_1 = arith.constant 0 : i32
    return %c0_i32, %c0_i32_0 : i32, i32
  }
  func.func @transform_1(%arg0: i32, %arg1: i32) -> (i32, i32) {
    %c0_i32 = arith.constant 0 : i32
    %c0_i32_0 = arith.constant 0 : i32
    %c0_i32_1 = arith.constant 0 : i32
    return %c0_i32, %c0_i32_0 : i32, i32
  }
  func.func @transform_2(%arg0: i32, %arg1: i32) -> (i32, i32) {
    %c0_i32 = arith.constant 0 : i32
    %c0_i32_0 = arith.constant 0 : i32
    %c0_i32_1 = arith.constant 0 : i32
    return %c0_i32, %c0_i32_0 : i32, i32
  }
  func.func @transform_3(%arg0: i32, %arg1: i32) -> (i32, i32) {
    %c1_i32 = arith.constant 1 : i32
    %0 = arith.muli %arg0, %c1_i32 : i32
    %1 = arith.addi %0, %arg1 : i32
    %c0_i32 = arith.constant 0 : i32
    %c0_i32_0 = arith.constant 0 : i32
    return %c0_i32, %1 : i32, i32
  }
  func.func @transform_4(%arg0: i32, %arg1: i32) -> (i32, i32) {
    %c1_i32 = arith.constant 1 : i32
    %0 = arith.muli %arg0, %c1_i32 : i32
    %1 = arith.addi %0, %arg1 : i32
    %c0_i32 = arith.constant 0 : i32
    %c0_i32_0 = arith.constant 0 : i32
    return %c0_i32, %1 : i32, i32
  }
  func.func @transform_5(%arg0: i32, %arg1: i32) -> (i32, i32) {
    %c1_i32 = arith.constant 1 : i32
    %0 = arith.muli %arg0, %c1_i32 : i32
    %1 = arith.addi %0, %arg1 : i32
    %c0_i32 = arith.constant 0 : i32
    %c0_i32_0 = arith.constant 0 : i32
    return %c0_i32, %1 : i32, i32
  }
  func.func @transform_6(%arg0: i32, %arg1: i32) -> (i32, i32, i32) {
    %c0_i32 = arith.constant 0 : i32
    %c0_i32_0 = arith.constant 0 : i32
    %c0_i32_1 = arith.constant 0 : i32
    return %arg0, %c0_i32, %c0_i32_0 : i32, i32, i32
  }
  func.func @transform_7(%arg0: i32, %arg1: i32) -> (i32, i32, i32) {
    %c0_i32 = arith.constant 0 : i32
    %c0_i32_0 = arith.constant 0 : i32
    %c0_i32_1 = arith.constant 0 : i32
    return %arg0, %c0_i32, %c0_i32_0 : i32, i32, i32
  }
}

</mosaic_0001>

<llo_original>
// kernel: tpu_custom_call.1
$region0: #{tpu_custom_call.1}
  #allocation0 [shape = 'u32[]', space=smem, size = 0x4, offset = 0x4, fixed_abs, tag = 'smem constant byte address 0x4 - core index']
  #allocation1 [shape = 'u32[144,128]{1,0:T(1,128)}', space=vmem, size = 0x12000, scoped, tag = 'internal scratch']
  #allocation2 [shape = 'f32[1,1]{1,0:T(1,128)}', space=vmem, size = 0x200, scoped, tag = 'scratch operand']
  #allocation3 [shape = 'f32[1,1]{1,0:T(1,128)}', space=vmem, size = 0x200, scoped, tag = 'scratch operand']
  %s0 = inlined_call_operand.hbm [shape: bf16[1,64], index: 0, kind: input, shape index: {}]
  %s1 = inlined_call_operand.hbm [shape: bf16[64,128], index: 1, kind: input, shape index: {}]
  %s2 = inlined_call_operand.vmem [shape: f32[1,128], index: 2, kind: input, shape index: {}]
  %s3 = inlined_call_operand.hbm [shape: bf16[64,128], index: 3, kind: input, shape index: {}]
  %s4 = inlined_call_operand.vmem [shape: f32[1,128], index: 4, kind: input, shape index: {}]
  %s5 = inlined_call_operand.hbm [shape: f32[1,128], index: 5, kind: output, shape index: {0}]
  %s6 = inlined_call_operand.hbm [shape: f32[1,1,128], index: 6, kind: output, shape index: {1}]
  %s7 = inlined_call_operand.hbm [shape: f32[1,1,1], index: 7, kind: output, shape index: {2}]
  %8 = xla_tuple %s5, %s6, %s7
  %s9 = sld [smem:[#allocation0]]
  $region66: #{tpu_custom_call.1} parent=0
    _
  %s11 = ssub.s32 1, %s9
  %s12 = scalar_select 0, %s11, %s9
  $region1: #{tpu_custom_call.1} parent=0
    #allocation4 [shape = 'u8[512]{0}', space=vmem, size = 0x400, scoped, tag = 'input window, operand 0, single buffered']
    #allocation5 [shape = 's32[1]{0}', space=sflag, size = 0x4, scoped, tag = 'scoped memory for tpu_custom_call.1']
    #allocation6 [shape = 's32[1]{0}', space=sflag, size = 0x4, scoped, tag = 'scoped memory for tpu_custom_call.1']
    #allocation7 [shape = 'u8[16384]{0}', space=vmem, size = 0x4000, scoped, tag = 'input window, operand 1, single buffered']
    #allocation8 [shape = 's32[1]{0}', space=sflag, size = 0x4, scoped, tag = 'scoped memory for tpu_custom_call.1']
    #allocation9 [shape = 'u8[16384]{0}', space=vmem, size = 0x4000, scoped, tag = 'input window, operand 3, single buffered']
    #allocation10 [shape = 'u8[512]{0}', space=vmem, size = 0x400, scoped, tag = 'output window, operand 0, single buffered']
    #allocation11 [shape = 'u8[512]{0}', space=vmem, size = 0x400, scoped, tag = 'output window, operand 1, single buffered']
    #allocation12 [shape = 's32[1]{0}', space=sflag, size = 0x4, scoped, tag = 'scoped memory for tpu_custom_call.1']
    #allocation13 [shape = 'u8[512]{0}', space=vmem, size = 0x400, scoped, tag = 'output window, operand 2, single buffered']
    %13 = vsyncpa [#allocation5], 0
    %14 = vsyncpa [#allocation8], 0
    %15 = vsyncpa [#allocation6], 0
    %16 = vsyncpa [#allocation12], 0
    // Predicated region
    $region2: #{tpu_custom_call.1} parent=1 // pred_check
      _
    $region3: #{tpu_custom_call.1} parent=1 // pred_check_branch
      %18 = sbr.rel (0) target = $region5
    $region4: #{tpu_custom_call.1} parent=1 // pred_region
      %s20 = ssub.s32 16, 16
      %21 = vsyncadd [#allocation5], %s20
      %s23 = sshll.u32 [#allocation4], 4
      %s24 = int_to_ptr.vmem [resolvable:$true] %s23
      %26 = dma.hbm_to_vmem [thread:$0]  %s0, 16, %s24, [#allocation5]
    $region5: #{tpu_custom_call.1} parent=1 // pred_fallthru
      _
    // Predicated region
    $region6: #{tpu_custom_call.1} parent=1 // pred_check
      _
    $region7: #{tpu_custom_call.1} parent=1 // pred_check_branch
      %28 = sbr.rel (0) target = $region9
    $region8: #{tpu_custom_call.1} parent=1 // pred_region
      %s30 = ssub.s32 512, 512
      %31 = vsyncadd [#allocation8], %s30
      %s32 = sshll.u32 [#allocation7], 4
      %s33 = int_to_ptr.vmem [resolvable:$true] %s32
      %38 = dma.hbm_to_vmem [thread:$0]  %s1, 512, %s33, [#allocation8], 64, 64, 4
    $region9: #{tpu_custom_call.1} parent=1 // pred_fallthru
      _
    // Predicated region
    $region10: #{tpu_custom_call.1} parent=1 // pred_check
      _
    $region11: #{tpu_custom_call.1} parent=1 // pred_check_branch
      %40 = sbr.rel (0) target = $region13
    $region12: #{tpu_custom_call.1} parent=1 // pred_region
      _
    $region13: #{tpu_custom_call.1} parent=1 // pred_fallthru
      _
    // Predicated region
    $region14: #{tpu_custom_call.1} parent=1 // pred_check
      _
    $region15: #{tpu_custom_call.1} parent=1 // pred_check_branch
      %42 = sbr.rel (0) target = $region17
    $region16: #{tpu_custom_call.1} parent=1 // pred_region
      %s43 = sadd.s32 0, 0
      %s45 = ssub.s32 512, 512
      %46 = vsyncadd [#allocation8], %s45
      %s47 = smul.addr %s43, 64
      %s48 = scalar_lea.hbm %s3, %s47
      %s49 = sshll.u32 [#allocation9], 4
      %s50 = int_to_ptr.vmem [resolvable:$true] %s49
      %55 = dma.hbm_to_vmem [thread:$0]  %s48, 512, %s50, [#allocation8], 64, 64, 4
    $region17: #{tpu_custom_call.1} parent=1 // pred_fallthru
      _
    // Predicated region
    $region18: #{tpu_custom_call.1} parent=1 // pred_check
      _
    $region19: #{tpu_custom_call.1} parent=1 // pred_check_branch
      %57 = sbr.rel (0) target = $region21
    $region20: #{tpu_custom_call.1} parent=1 // pred_region
      %s58 = sadd.s32 0, 0
      %p59 = scmp.lt.s32.totalorder %s58, 0
      %s60 = scalar_select %p59, %s58, 0
      %s61 = scalar_lea.vmem %s4, %s60
      %s62 = sadd.s32 0, 0
    $region21: #{tpu_custom_call.1} parent=1 // pred_fallthru
      _
    // Predicated region
    $region22: #{tpu_custom_call.1} parent=1 // pred_check
      _
    $region23: #{tpu_custom_call.1} parent=1 // pred_check_branch
      %64 = sbr.rel (0) target = $region25
    $region24: #{tpu_custom_call.1} parent=1 // pred_region
      %65 = dma.done [#allocation5], 16
    $region25: #{tpu_custom_call.1} parent=1 // pred_fallthru
      _
    // Predicated region
    $region26: #{tpu_custom_call.1} parent=1 // pred_check
      _
    $region27: #{tpu_custom_call.1} parent=1 // pred_check_branch
      %67 = sbr.rel (0) target = $region29
    $region28: #{tpu_custom_call.1} parent=1 // pred_region
      %68 = dma.done [#allocation8], 512
    $region29: #{tpu_custom_call.1} parent=1 // pred_fallthru
      _
    // Predicated region
    $region30: #{tpu_custom_call.1} parent=1 // pred_check
      _
    $region31: #{tpu_custom_call.1} parent=1 // pred_check_branch
      %70 = sbr.rel (0) target = $region33
    $region32: #{tpu_custom_call.1} parent=1 // pred_region
      %71 = dma.done [#allocation8], 512
    $region33: #{tpu_custom_call.1} parent=1 // pred_fallthru
      _
    %s72 = sadd.s32 0, 0
    %p73 = scmp.lt.s32.totalorder %s72, 0
    %s74 = scalar_select %p73, %s72, 0
    %s75 = scalar_lea.vmem %s4, %s74
    %s76 = sadd.s32 0, 0
    %s77 = sadd.s32 0, 0
    %p78 = scmp.lt.s32.totalorder %s77, 0
    %s79 = scalar_select %p78, %s77, 0
    %s80 = scalar_lea.vmem %s4, %s79
    %s81 = sadd.s32 0, 0
    %s82 = sadd.s32 0, 0
    %v84 = vld [vmem:[#allocation4] sm:$0x1]
    %p85 = scmp.eq.s32.totalorder 0, 0
    // Predicated region
    $region34: #{tpu_custom_call.1} parent=1 // pred_check
      %p86 = pneg %p85
    $region35: #{tpu_custom_call.1} parent=1 // pred_check_branch
      %88 = sbr.rel (%p86) target = $region37
    $region36: #{tpu_custom_call.1} parent=1 // pred_region
      %vm89 = vcmask 0
      %90 = vst.msk [vmem:[#allocation2] sm:$0x1] %vm89, -inf
      %91 = vst.msk [vmem:[#allocation3] sm:$0x1] %vm89, 0.0
      %v92 = vld [vmem:[#allocation7] sm:$0xf]
      %v93 = vld [vmem:[#allocation7 + $0x4] sm:$0xf]
      %v94 = vld [vmem:[#allocation7 + $0x8] sm:$0xf]
      %v95 = vld [vmem:[#allocation7 + $0xc] sm:$0xf]
      %v96 = vld [vmem:[#allocation7 + $0x10] sm:$0xf]
      %v97 = vld [vmem:[#allocation7 + $0x14] sm:$0xf]
      %v98 = vld [vmem:[#allocation7 + $0x18] sm:$0xf]
      %v99 = vld [vmem:[#allocation7 + $0x1c] sm:$0xf]
      %v100 = vld [vmem:[%s2] sm:$0x1]
      %v109 = vunpack.c.l.b16 %v92
      %v110 = vunpack.c.l.b16 %v93
      %v111 = vunpack.c.l.b16 %v94
      %v112 = vunpack.c.l.b16 %v95
      %v113 = vunpack.c.l.b16 %v96
      %v114 = vunpack.c.l.b16 %v97
      %v115 = vunpack.c.l.b16 %v98
      %v116 = vunpack.c.l.b16 %v99
      %v117 = vpack.c.b16 %v110, %v109
      %v118 = vpack.c.b16 %v112, %v111
      %v119 = vpack.c.b16 %v114, %v113
      %v120 = vpack.c.b16 %v116, %v115
      %vm125 = vcmask 523264
      %v127 = vsel %vm125, %v84, 0
      %129 = vmatprep.subr.bf16.mxu0 0
      %130 = vmatpush1.bf16.msra.mxu0 %v117
      %131 = vmatprep.subr.bf16.mxu0 0
      %132 = vmatpush1.bf16.msra.mxu0 %v118
      %133 = vmatprep.subr.bf16.mxu0 0
      %134 = vmatpush1.bf16.msra.mxu0 %v119
      %135 = vmatprep.subr.bf16.mxu0 0
      %136 = vmatpush1.bf16.msra.mxu0 %v120
      %137 = vmatprep.subr.bf16.mxu0 0
      %138 = vmatpush1.bf16.msra.mxu0 0
      %139 = vmatprep.subr.bf16.mxu0 0
      %140 = vmatpush1.bf16.msra.mxu0 0
      %141 = vmatprep.subr.bf16.mxu0 0
      %142 = vmatpush1.bf16.msra.mxu0 0
      %143 = vmatprep.subr.bf16.mxu0 0
      %144 = vmatpush1.bf16.msra.mxu0 0
      %145 = vmatprep.subr.bf16.mxu0 0
      %146 = vmatpush1.bf16.msra.mxu0 0
      %147 = vmatprep.subr.bf16.mxu0 0
      %148 = vmatpush1.bf16.msra.mxu0 0
      %149 = vmatprep.subr.bf16.mxu0 0
      %150 = vmatpush1.bf16.msra.mxu0 0
      %151 = vmatprep.subr.bf16.mxu0 0
      %152 = vmatpush1.bf16.msra.mxu0 0
      %153 = vmatprep.subr.bf16.mxu0 0
      %154 = vmatpush1.bf16.msra.mxu0 0
      %155 = vmatprep.subr.bf16.mxu0 0
      %156 = vmatpush1.bf16.msra.mxu0 0
      %157 = vmatprep.subr.bf16.mxu0 0
      %158 = vmatpush1.bf16.msra.mxu0 0
      %159 = vmatprep.subr.bf16.mxu0 0
      %160 = vmatpush1.bf16.msra.mxu0 0
      %161 = vmatprep.mubr.bf16.mxu0 0
      %162 = vmatmul.mubr.bf16.gmra.mrb[0].mxu0 %v127
      %v163 = vpop.f32.mrb[0].mxu0
      %v164 = vadd.f32 %v100, %v163
      %v165 = vpop.f32.mrb[0].mxu0
      %v166 = vpop.f32.mrb[0].mxu0
      %v167 = vpop.f32.mrb[0].mxu0
      %168 = vdwg.mxu0
      %169 = vst [vmem:[#allocation11] sm:$0x1] %v164
    $region37: #{tpu_custom_call.1} parent=1 // pred_fallthru
      _
    %v170 = vld [vmem:[#allocation9] sm:$0xf]
    %v171 = vld [vmem:[#allocation9 + $0x4] sm:$0xf]
    %v172 = vld [vmem:[#allocation9 + $0x8] sm:$0xf]
    %v173 = vld [vmem:[#allocation9 + $0xc] sm:$0xf]
    %v174 = vld [vmem:[#allocation9 + $0x10] sm:$0xf]
    %v175 = vld [vmem:[#allocation9 + $0x14] sm:$0xf]
    %v176 = vld [vmem:[#allocation9 + $0x18] sm:$0xf]
    %v177 = vld [vmem:[#allocation9 + $0x1c] sm:$0xf]
    %v178 = vld [vmem:[%s80] sm:$0x1]
    %v187 = vunpack.c.l.b16 %v170
    %v188 = vunpack.c.l.b16 %v171
    %v189 = vunpack.c.l.b16 %v172
    %v190 = vunpack.c.l.b16 %v173
    %v191 = vunpack.c.l.b16 %v174
    %v192 = vunpack.c.l.b16 %v175
    %v193 = vunpack.c.l.b16 %v176
    %v194 = vunpack.c.l.b16 %v177
    %v195 = vpack.c.b16 %v188, %v187
    %v196 = vpack.c.b16 %v190, %v189
    %v197 = vpack.c.b16 %v192, %v191
    %v198 = vpack.c.b16 %v194, %v193
    %vm203 = vcmask 523264
    %v205 = vsel %vm203, %v84, 0
    %207 = vmatprep.subr.bf16.mxu0 0
    %208 = vmatpush1.bf16.msra.mxu0 %v195
    %209 = vmatprep.subr.bf16.mxu0 0
    %210 = vmatpush1.bf16.msra.mxu0 %v196
    %211 = vmatprep.subr.bf16.mxu0 0
    %212 = vmatpush1.bf16.msra.mxu0 %v197
    %213 = vmatprep.subr.bf16.mxu0 0
    %214 = vmatpush1.bf16.msra.mxu0 %v198
    %215 = vmatprep.subr.bf16.mxu0 0
    %216 = vmatpush1.bf16.msra.mxu0 0
    %217 = vmatprep.subr.bf16.mxu0 0
    %218 = vmatpush1.bf16.msra.mxu0 0
    %219 = vmatprep.subr.bf16.mxu0 0
    %220 = vmatpush1.bf16.msra.mxu0 0
    %221 = vmatprep.subr.bf16.mxu0 0
    %222 = vmatpush1.bf16.msra.mxu0 0
    %223 = vmatprep.subr.bf16.mxu0 0
    %224 = vmatpush1.bf16.msra.mxu0 0
    %225 = vmatprep.subr.bf16.mxu0 0
    %226 = vmatpush1.bf16.msra.mxu0 0
    %227 = vmatprep.subr.bf16.mxu0 0
    %228 = vmatpush1.bf16.msra.mxu0 0
    %229 = vmatprep.subr.bf16.mxu0 0
    %230 = vmatpush1.bf16.msra.mxu0 0
    %231 = vmatprep.subr.bf16.mxu0 0
    %232 = vmatpush1.bf16.msra.mxu0 0
    %233 = vmatprep.subr.bf16.mxu0 0
    %234 = vmatpush1.bf16.msra.mxu0 0
    %235 = vmatprep.subr.bf16.mxu0 0
    %236 = vmatpush1.bf16.msra.mxu0 0
    %237 = vmatprep.subr.bf16.mxu0 0
    %238 = vmatpush1.bf16.msra.mxu0 0
    %239 = vmatprep.mubr.bf16.mxu0 0
    %240 = vmatmul.mubr.bf16.gmra.mrb[0].mxu0 %v205
    %v241 = vpop.f32.mrb[0].mxu0
    %v242 = vadd.f32 %v178, %v241
    %v243 = vpop.f32.mrb[0].mxu0
    %v244 = vpop.f32.mrb[0].mxu0
    %v245 = vpop.f32.mrb[0].mxu0
    %246 = vdwg.mxu0
    %247 = vst [vmem:[#allocation10] sm:$0x1] %v242
    %v248 = vld [vmem:[#allocation2] sm:$0x1]
    %vm249 = vcmask 1040384
    %v250 = vsel %vm249, %v242, -inf
    %251 = vmax.xlane.f32.xlu0 %v250
    %v252 = vpop.xlane.xlu0 %251
    %v253 = vmax.f32 %v248, %v252
    %v254 = vld [vmem:[#allocation3] sm:$0x1]
    %v255 = vsub.f32 %v248, %v253
    %v256 = vmul.f32 %v255, 1.442695
    %v257 = vpow.pop %v256
    %v258 = vmul.f32 %v254, %v257
    %260 = vset.pattern.permute.xlu0 0
    %261 = vperm.xlu0 %260, %v253
    %v262 = vpop.permute.xlu0 %261
    %v264 = vlaneseq
    %v265 = vshrl.u32 %v264, 7
    %v266 = vsub.s32 0, %v265
    %v267 = vrot.slane %v262, %v266
    %v268 = vsub.f32 %v242, %v267
    %v269 = vmul.f32 %v268, 1.442695
    %v270 = vpow.pop %v269
    %v271 = vsel %vm249, %v270, 0.0
    %272 = vadd.xlane.f32.xlu0 %v271
    %v273 = vpop.xlane.xlu0 %272
    %v274 = vadd.f32 %v258, %v273
    %vm275 = vcmask 0
    %276 = vst.msk [vmem:[#allocation2] sm:$0x1] %vm275, %v253
    %277 = vst.msk [vmem:[#allocation3] sm:$0x1] %vm275, %v274
    // Predicated region
    $region38: #{tpu_custom_call.1} parent=1 // pred_check
      %p278 = pneg %p85
    $region39: #{tpu_custom_call.1} parent=1 // pred_check_branch
      %280 = sbr.rel (%p278) target = $region41
    $region40: #{tpu_custom_call.1} parent=1 // pred_region
      %v281 = vlog2.pop %v274
      %v282 = vmul.f32 %v281, 0.6931472
      %v283 = vadd.f32 %v253, %v282
      %284 = vst.msk [vmem:[#allocation13] sm:$0x1] %vm275, %v283
    $region41: #{tpu_custom_call.1} parent=1 // pred_fallthru
      _
    // Predicated region
    $region42: #{tpu_custom_call.1} parent=1 // pred_check
      _
    $region43: #{tpu_custom_call.1} parent=1 // pred_check_branch
      %286 = sbr.rel (0) target = $region45
    $region44: #{tpu_custom_call.1} parent=1 // pred_region
      %s287 = sadd.s32 0, 0
      %s289 = ssub.s32 16, 16
      %290 = vsyncadd [#allocation6], %s289
      %s291 = smul.addr %s287, 16
      %s292 = scalar_lea.hbm %s5, %s291
      %s294 = sshll.u32 [#allocation10], 4
      %s295 = int_to_ptr.vmem [resolvable:$true] %s294
      %297 = dma.vmem_to_hbm [thread:$0]  %s295, 16, %s292, [#allocation6]
    $region45: #{tpu_custom_call.1} parent=1 // pred_fallthru
      _
    // Predicated region
    $region46: #{tpu_custom_call.1} parent=1 // pred_check
      _
    $region47: #{tpu_custom_call.1} parent=1 // pred_check_branch
      %299 = sbr.rel (0) target = $region49
    $region48: #{tpu_custom_call.1} parent=1 // pred_region
      %s301 = ssub.s32 16, 16
      %302 = vsyncadd [#allocation12], %s301
      %s304 = sshll.u32 [#allocation11], 4
      %s305 = int_to_ptr.vmem [resolvable:$true] %s304
      %307 = dma.vmem_to_hbm [thread:$0]  %s305, 16, %s6, [#allocation12]
    $region49: #{tpu_custom_call.1} parent=1 // pred_fallthru
      _
    // Predicated region
    $region50: #{tpu_custom_call.1} parent=1 // pred_check
      _
    $region51: #{tpu_custom_call.1} parent=1 // pred_check_branch
      %309 = sbr.rel (0) target = $region53
    $region52: #{tpu_custom_call.1} parent=1 // pred_region
      %s311 = ssub.s32 16, 16
      %312 = vsyncadd [#allocation12], %s311
      %s314 = sshll.u32 [#allocation13], 4
      %s315 = int_to_ptr.vmem [resolvable:$true] %s314
      %317 = dma.vmem_to_hbm [thread:$0]  %s315, 16, %s7, [#allocation12]
    $region53: #{tpu_custom_call.1} parent=1 // pred_fallthru
      _
    // Predicated region
    $region54: #{tpu_custom_call.1} parent=1 // pred_check
      _
    $region55: #{tpu_custom_call.1} parent=1 // pred_check_branch
      %319 = sbr.rel (0) target = $region57
    $region56: #{tpu_custom_call.1} parent=1 // pred_region
      %320 = dma.done [#allocation6], 16
    $region57: #{tpu_custom_call.1} parent=1 // pred_fallthru
      _
    // Predicated region
    $region58: #{tpu_custom_call.1} parent=1 // pred_check
      _
    $region59: #{tpu_custom_call.1} parent=1 // pred_check_branch
      %322 = sbr.rel (0) target = $region61
    $region60: #{tpu_custom_call.1} parent=1 // pred_region
      %323 = dma.done [#allocation12], 16
    $region61: #{tpu_custom_call.1} parent=1 // pred_fallthru
      _
    // Predicated region
    $region62: #{tpu_custom_call.1} parent=1 // pred_check
      _
    $region63: #{tpu_custom_call.1} parent=1 // pred_check_branch
      %325 = sbr.rel (0) target = $region65
    $region64: #{tpu_custom_call.1} parent=1 // pred_region
      %326 = dma.done [#allocation12], 16
    $region65: #{tpu_custom_call.1} parent=1 // pred_fallthru
      _
    %327 = vsyncpa [#allocation5], 1
    %328 = vsyncpa [#allocation8], 1
    %329 = vsyncpa [#allocation6], 1
    %330 = vsyncpa [#allocation12], 1

</llo_original>
